<compile_context>
chip_gen: v7x
topology: tpu7x:2x2x1
jax: 0.10.0
libtpu: 0.0.40
codegen_flags: <defaults>
</compile_context>

<pallas_src>
import functools

import jax
import jax.numpy as jnp
from jax.experimental import pallas as pl
from jax.experimental.pallas import tpu as pltpu

EPS = 1e-5  # nn.InstanceNorm1d default eps


def csl_kernel(x_ref, sc_ref, bs_ref, wc_ref, bc_ref, out_ref, *, n_valid, use_mxu):
    # x_ref:   (Bt, Ci, Np)  padded input tile (Np = lane-dense spatial width)
    # sc_ref:  (Bt, Co, 1)   precomputed per-batch scale column
    # bs_ref:  (Bt, Co, 1)   precomputed per-batch bias column
    # wc_ref:  (Co, Ci)      Conv1d weight (kernel_size=1 squeezed)
    # bc_ref:  (Co, 1)       Conv1d bias
    # out_ref: (Bt, Co, Np)
    bt, ci, np_ = x_ref.shape
    co = wc_ref.shape[0]

    wc = wc_ref[...]                                   # (Co, Ci)
    bc = bc_ref[...]                                   # (Co, 1)

    masked = np_ != n_valid
    if masked:
        lane = jax.lax.broadcasted_iota(jnp.int32, (co, np_), 1)
        mask = (lane < n_valid).astype(jnp.float32)    # (Co, Np)
    inv_n = 1.0 / float(n_valid)

    for b in range(bt):                                # static unroll (small Bt)
        xb = x_ref[b]                                  # (Ci, Np)

        # 1x1 Conv = channel contraction.  Tiny Ci -> VPU FMAs; big Ci -> MXU.
        if use_mxu:
            h = jnp.dot(wc, xb, preferred_element_type=jnp.float32)
        else:
            h = jnp.zeros((co, np_), jnp.float32)
            for i in range(ci):
                h = h + wc[:, i:i + 1] * xb[i:i + 1, :]
        h = h + bc                                     # (Co, Np)

        # InstanceNorm1d (affine=False): per-channel stats over the *valid* N,
        # biased variance, eps=1e-5.  Padded lanes excluded via mask.
        if masked:
            mean = jnp.sum(h * mask, axis=1, keepdims=True) * inv_n
            cent = h - mean
            cm = cent * mask
            var = jnp.sum(cm * cm, axis=1, keepdims=True) * inv_n
        else:
            mean = jnp.mean(h, axis=1, keepdims=True)
            cent = h - mean
            var = jnp.mean(cent * cent, axis=1, keepdims=True)
        hn = cent * jax.lax.rsqrt(var + EPS)           # (Co, Np)

        # Affine modulation from ctx (precomputed in wrapper), broadcast over N.
        out_ref[b] = hn * sc_ref[b] + bs_ref[b]        # (Co, Np)


@functools.partial(jax.jit, static_argnames=("block_b",))
def concat_squash_linear(x, ctx, w_conv, b_conv, w_scale, b_scale, w_bias,
                         *, block_b=1):
    """x: (B, Ci, N), ctx: (B, Cc) -> (B, Co, N).  Mirrors the PyTorch module."""
    B, Ci, N = x.shape
    Co = w_conv.shape[0]

    # Hoisted: per-batch scale/bias as one batched matmul each (reviewer P-opt).
    scale_col = (ctx @ w_scale.T + b_scale).reshape(B, Co, 1)
    bias_col = (ctx @ w_bias.T).reshape(B, Co, 1)
    b_conv_col = b_conv.reshape(Co, 1)

    # Lane-dense spatial width (multiple of 128); zero-pad x, slice output.
    Np = max(128, ((N + 127) // 128) * 128)
    x_in = jnp.pad(x, ((0, 0), (0, 0), (0, Np - N))) if Np != N else x

    bt = max(1, min(block_b, B))
    grid = (pl.cdiv(B, bt),)

    kernel = functools.partial(csl_kernel, n_valid=N, use_mxu=(Ci >= 16))

    out = pl.pallas_call(
        kernel,
        out_shape=jax.ShapeDtypeStruct((B, Co, Np), jnp.float32),
        grid_spec=pltpu.PrefetchScalarGridSpec(
            num_scalar_prefetch=0,
            grid=grid,
            in_specs=[
                pl.BlockSpec((bt, Ci, Np), lambda b: (b, 0, 0)),  # x (padded)
                pl.BlockSpec((bt, Co, 1), lambda b: (b, 0, 0)),   # scale col
                pl.BlockSpec((bt, Co, 1), lambda b: (b, 0, 0)),   # bias col
                pl.BlockSpec((Co, Ci), lambda b: (0, 0)),         # conv weight
                pl.BlockSpec((Co, 1), lambda b: (0, 0)),          # conv bias
            ],
            out_specs=pl.BlockSpec((bt, Co, Np), lambda b: (b, 0, 0)),
        ),
        compiler_params=pltpu.CompilerParams(
            dimension_semantics=("parallel",)),
    )(x_in, scale_col, bias_col, w_conv, b_conv_col)

    if Np != N:
        out = out[:, :, :N]
    return out


def reference(x, ctx, w_conv, b_conv, w_scale, b_scale, w_bias):
    """Pure-JAX reference matching the PyTorch forward."""
    h = jnp.einsum("oc,bcn->bon", w_conv, x) + b_conv[None, :, None]
    mean = jnp.mean(h, axis=2, keepdims=True)
    var = jnp.mean((h - mean) ** 2, axis=2, keepdims=True)
    hn = (h - mean) / jnp.sqrt(var + EPS)
    scale = (ctx @ w_scale.T + b_scale)[:, :, None]
    bias = (ctx @ w_bias.T)[:, :, None]
    return hn * scale + bias


if __name__ == "__main__":
    # Small shapes consistent with the module: batch=2, dim_in=4, dim_out=32,
    # dim_ctx=8, seq(points)=16.
    B, Ci, Co, Cc, N = 2, 4, 32, 8, 16

    key = jax.random.PRNGKey(0)
    kx, kc, k1, k2, k3, k4, k5 = jax.random.split(key, 7)

    x = jax.random.normal(kx, (B, Ci, N), dtype=jnp.float32)
    ctx = jax.random.normal(kc, (B, Cc), dtype=jnp.float32)

    # Deterministic parameter init (shapes from the module's __init__).
    w_conv = 0.1 * jax.random.normal(k1, (Co, Ci), dtype=jnp.float32)   # Conv1d weight (Co,Ci,1) squeezed
    b_conv = 0.1 * jax.random.normal(k2, (Co,), dtype=jnp.float32)
    w_scale = 0.1 * jax.random.normal(k3, (Co, Cc), dtype=jnp.float32)  # Linear(dim_ctx, dim_out)
    b_scale = 0.1 * jax.random.normal(k4, (Co,), dtype=jnp.float32)
    w_bias = 0.1 * jax.random.normal(k5, (Co, Cc), dtype=jnp.float32)   # Linear(dim_ctx, dim_out, bias=False)

    out = concat_squash_linear(x, ctx, w_conv, b_conv, w_scale, b_scale, w_bias)
    out = jax.block_until_ready(out)

    ref = reference(x, ctx, w_conv, b_conv, w_scale, b_scale, w_bias)
    assert out.shape == (B, Co, N)
    assert jnp.allclose(out, ref, atol=1e-4, rtol=1e-4), "mismatch vs reference"

    print("KERNEL_OK")
</pallas_src>

<mosaic_0001>
module attributes {stable_mosaic.version = 11 : i64} {
  func.func @csl_kernel(%arg0: i32, %arg1: memref<1x4x128xf32, #tpu.memory_space<vmem>>, %arg2: memref<1x32x1xf32, #tpu.memory_space<vmem>>, %arg3: memref<1x32x1xf32, #tpu.memory_space<vmem>>, %arg4: memref<32x4xf32, #tpu.memory_space<vmem>>, %arg5: memref<32x1xf32, #tpu.memory_space<vmem>>, %arg6: memref<1x32x128xf32, #tpu.memory_space<vmem>>) attributes {dimension_semantics = [#tpu.dimension_semantics<parallel>], iteration_bounds = array<i64: 2>, scalar_prefetch = 0 : i64, scratch_operands = 0 : i64, tpu.core_type = #tpu.core_type<tc>, window_params = [{transform_indices = @transform_0, window_bounds = array<i64: 1, 4, 128>}, {transform_indices = @transform_1, window_bounds = array<i64: 1, 32, 1>}, {transform_indices = @transform_2, window_bounds = array<i64: 1, 32, 1>}, {pipeline_mode = #tpu.pipeline_mode<synchronous>, transform_indices = @transform_3, window_bounds = array<i64: 32, 4>}, {pipeline_mode = #tpu.pipeline_mode<synchronous>, transform_indices = @transform_4, window_bounds = array<i64: 32, 1>}, {transform_indices = @transform_5, window_bounds = array<i64: 1, 32, 128>}]} {
    %c0 = arith.constant 0 : index
    %c0_0 = arith.constant 0 : index
    %0 = vector.load %arg4[%c0, %c0_0] : memref<32x4xf32, #tpu.memory_space<vmem>>, vector<32x4xf32>
    %c0_1 = arith.constant 0 : index
    %c0_2 = arith.constant 0 : index
    %1 = vector.load %arg5[%c0_1, %c0_2] : memref<32x1xf32, #tpu.memory_space<vmem>>, vector<32x1xf32>
    %2 = tpu.iota {dimensions = array<i32: 1>} : vector<32x128xi32>
    %c16_i32 = arith.constant 16 : i32
    %3 = vector.broadcast %c16_i32 : i32 to vector<32x128xi32>
    %4 = arith.cmpi slt, %2, %3 : vector<32x128xi32>
    %5 = arith.extui %4 : vector<32x128xi1> to vector<32x128xi32>
    %6 = arith.sitofp %5 : vector<32x128xi32> to vector<32x128xf32>
    %c0_3 = arith.constant 0 : index
    %c0_4 = arith.constant 0 : index
    %c0_5 = arith.constant 0 : index
    %7 = vector.load %arg1[%c0_3, %c0_4, %c0_5] : memref<1x4x128xf32, #tpu.memory_space<vmem>>, vector<1x4x128xf32>
    %8 = vector.shape_cast %7 : vector<1x4x128xf32> to vector<4x128xf32>
    %cst = arith.constant 0.000000e+00 : f32
    %9 = vector.broadcast %cst : f32 to vector<32x128xf32>
    %10 = vector.extract_strided_slice %0 {offsets = [0, 0], sizes = [32, 1], strides = [1, 1]} : vector<32x4xf32> to vector<32x1xf32>
    %11 = vector.extract_strided_slice %8 {offsets = [0, 0], sizes = [1, 128], strides = [1, 1]} : vector<4x128xf32> to vector<1x128xf32>
    %12 = vector.broadcast %10 : vector<32x1xf32> to vector<32x128xf32>
    %13 = vector.broadcast %11 : vector<1x128xf32> to vector<32x128xf32>
    %14 = arith.mulf %12, %13 : vector<32x128xf32>
    %15 = arith.addf %9, %14 : vector<32x128xf32>
    %16 = vector.extract_strided_slice %0 {offsets = [0, 1], sizes = [32, 1], strides = [1, 1]} : vector<32x4xf32> to vector<32x1xf32>
    %17 = vector.extract_strided_slice %8 {offsets = [1, 0], sizes = [1, 128], strides = [1, 1]} : vector<4x128xf32> to vector<1x128xf32>
    %18 = vector.broadcast %16 : vector<32x1xf32> to vector<32x128xf32>
    %19 = vector.broadcast %17 : vector<1x128xf32> to vector<32x128xf32>
    %20 = arith.mulf %18, %19 : vector<32x128xf32>
    %21 = arith.addf %15, %20 : vector<32x128xf32>
    %22 = vector.extract_strided_slice %0 {offsets = [0, 2], sizes = [32, 1], strides = [1, 1]} : vector<32x4xf32> to vector<32x1xf32>
    %23 = vector.extract_strided_slice %8 {offsets = [2, 0], sizes = [1, 128], strides = [1, 1]} : vector<4x128xf32> to vector<1x128xf32>
    %24 = vector.broadcast %22 : vector<32x1xf32> to vector<32x128xf32>
    %25 = vector.broadcast %23 : vector<1x128xf32> to vector<32x128xf32>
    %26 = arith.mulf %24, %25 : vector<32x128xf32>
    %27 = arith.addf %21, %26 : vector<32x128xf32>
    %28 = vector.extract_strided_slice %0 {offsets = [0, 3], sizes = [32, 1], strides = [1, 1]} : vector<32x4xf32> to vector<32x1xf32>
    %29 = vector.extract_strided_slice %8 {offsets = [3, 0], sizes = [1, 128], strides = [1, 1]} : vector<4x128xf32> to vector<1x128xf32>
    %30 = vector.broadcast %28 : vector<32x1xf32> to vector<32x128xf32>
    %31 = vector.broadcast %29 : vector<1x128xf32> to vector<32x128xf32>
    %32 = arith.mulf %30, %31 : vector<32x128xf32>
    %33 = arith.addf %27, %32 : vector<32x128xf32>
    %34 = vector.broadcast %1 : vector<32x1xf32> to vector<32x128xf32>
    %35 = arith.addf %33, %34 : vector<32x128xf32>
    %36 = arith.mulf %35, %6 : vector<32x128xf32>
    %cst_6 = arith.constant dense<0.000000e+00> : vector<32xf32>
    %37 = vector.multi_reduction <add>, %36, %cst_6 [1] : vector<32x128xf32> to vector<32xf32>
    %38 = vector.shape_cast %37 : vector<32xf32> to vector<32x1xf32>
    %cst_7 = arith.constant 6.250000e-02 : f32
    %39 = vector.broadcast %cst_7 : f32 to vector<32x1xf32>
    %40 = arith.mulf %38, %39 : vector<32x1xf32>
    %41 = vector.broadcast %40 : vector<32x1xf32> to vector<32x128xf32>
    %42 = arith.subf %35, %41 : vector<32x128xf32>
    %43 = arith.mulf %42, %6 : vector<32x128xf32>
    %44 = arith.mulf %43, %43 : vector<32x128xf32>
    %cst_8 = arith.constant dense<0.000000e+00> : vector<32xf32>
    %45 = vector.multi_reduction <add>, %44, %cst_8 [1] : vector<32x128xf32> to vector<32xf32>
    %46 = vector.shape_cast %45 : vector<32xf32> to vector<32x1xf32>
    %cst_9 = arith.constant 6.250000e-02 : f32
    %47 = vector.broadcast %cst_9 : f32 to vector<32x1xf32>
    %48 = arith.mulf %46, %47 : vector<32x1xf32>
    %cst_10 = arith.constant 9.99999974E-6 : f32
    %49 = vector.broadcast %cst_10 : f32 to vector<32x1xf32>
    %50 = arith.addf %48, %49 : vector<32x1xf32>
    %51 = math.rsqrt %50 : vector<32x1xf32>
    %52 = vector.broadcast %51 : vector<32x1xf32> to vector<32x128xf32>
    %53 = arith.mulf %42, %52 : vector<32x128xf32>
    %c0_11 = arith.constant 0 : index
    %c0_12 = arith.constant 0 : index
    %c0_13 = arith.constant 0 : index
    %54 = vector.load %arg2[%c0_11, %c0_12, %c0_13] : memref<1x32x1xf32, #tpu.memory_space<vmem>>, vector<1x32x1xf32>
    %55 = vector.shape_cast %54 : vector<1x32x1xf32> to vector<32x1xf32>
    %56 = vector.broadcast %55 : vector<32x1xf32> to vector<32x128xf32>
    %57 = arith.mulf %53, %56 : vector<32x128xf32>
    %c0_14 = arith.constant 0 : index
    %c0_15 = arith.constant 0 : index
    %c0_16 = arith.constant 0 : index
    %58 = vector.load %arg3[%c0_14, %c0_15, %c0_16] : memref<1x32x1xf32, #tpu.memory_space<vmem>>, vector<1x32x1xf32>
    %59 = vector.shape_cast %58 : vector<1x32x1xf32> to vector<32x1xf32>
    %60 = vector.broadcast %59 : vector<32x1xf32> to vector<32x128xf32>
    %61 = arith.addf %57, %60 : vector<32x128xf32>
    %c0_17 = arith.constant 0 : index
    %c0_18 = arith.constant 0 : index
    %c0_19 = arith.constant 0 : index
    %62 = vector.load %arg6[%c0_17, %c0_18, %c0_19] : memref<1x32x128xf32, #tpu.memory_space<vmem>>, vector<1x32x128xf32>
    %63 = vector.shape_cast %62 : vector<1x32x128xf32> to vector<32x128xf32>
    %64 = vector.shape_cast %61 : vector<32x128xf32> to vector<1x32x128xf32>
    tpu.vector_store %arg6[%c0_17, %c0_18, %c0_19], %64 {strides = array<i32>} : memref<1x32x128xf32, #tpu.memory_space<vmem>>, vector<1x32x128xf32>,
    return
  }
  func.func @transform_0(%arg0: i32) -> (i32, i32, i32) {
    %c0_i32 = arith.constant 0 : i32
    %c0_i32_0 = arith.constant 0 : i32
    %c0_i32_1 = arith.constant 0 : i32
    return %arg0, %c0_i32, %c0_i32_0 : i32, i32, i32
  }
  func.func @transform_1(%arg0: i32) -> (i32, i32, i32) {
    %c0_i32 = arith.constant 0 : i32
    %c0_i32_0 = arith.constant 0 : i32
    %c0_i32_1 = arith.constant 0 : i32
    return %arg0, %c0_i32, %c0_i32_0 : i32, i32, i32
  }
  func.func @transform_2(%arg0: i32) -> (i32, i32, i32) {
    %c0_i32 = arith.constant 0 : i32
    %c0_i32_0 = arith.constant 0 : i32
    %c0_i32_1 = arith.constant 0 : i32
    return %arg0, %c0_i32, %c0_i32_0 : i32, i32, i32
  }
  func.func @transform_3(%arg0: i32) -> (i32, i32) {
    %c0_i32 = arith.constant 0 : i32
    %c0_i32_0 = arith.constant 0 : i32
    %c0_i32_1 = arith.constant 0 : i32
    return %c0_i32, %c0_i32_0 : i32, i32
  }
  func.func @transform_4(%arg0: i32) -> (i32, i32) {
    %c0_i32 = arith.constant 0 : i32
    %c0_i32_0 = arith.constant 0 : i32
    %c0_i32_1 = arith.constant 0 : i32
    return %c0_i32, %c0_i32_0 : i32, i32
  }
  func.func @transform_5(%arg0: i32) -> (i32, i32, i32) {
    %c0_i32 = arith.constant 0 : i32
    %c0_i32_0 = arith.constant 0 : i32
    %c0_i32_1 = arith.constant 0 : i32
    return %arg0, %c0_i32, %c0_i32_0 : i32, i32, i32
  }
}

</mosaic_0001>

<llo_original>
// kernel: concat_squash_linear.1
$region0: #{concat_squash_linear.1}
  #allocation0 [shape = 'u32[]', space=smem, size = 0x4, offset = 0x4, fixed_abs, tag = 'smem constant byte address 0x4 - core index']
  #allocation1 [shape = 'u32[144,128]{1,0:T(1,128)}', space=vmem, size = 0x12000, scoped, tag = 'internal scratch']
  %s0 = inlined_call_operand.vmem [shape: f32[2,4,128], index: 0, kind: input, shape index: {}]
  %s1 = inlined_call_operand.vmem [shape: f32[2,32,1], index: 1, kind: input, shape index: {}]
  %s2 = inlined_call_operand.vmem [shape: f32[2,32,1], index: 2, kind: input, shape index: {}]
  %s3 = inlined_call_operand.vmem [shape: f32[32,4], index: 3, kind: input, shape index: {}]
  %s4 = inlined_call_operand.vmem [shape: f32[32,1], index: 4, kind: input, shape index: {}]
  %s5 = inlined_call_operand.vmem [shape: f32[2,32,128], index: 5, kind: output, shape index: {}]
  %s6 = sld [smem:[#allocation0]]
  $region53: #{concat_squash_linear.1} parent=0
    _
  %s8 = ssub.s32 1, %s6
  %s9 = scalar_select 0, %s8, %s6
  loop: start=0, step=1, limit=4
  $region2: #{concat_squash_linear.1} parent=0 // loop_pre_header
    _
  $region3: #{concat_squash_linear.1} parent=0 // loop_header
    %s11 = sphi 0, %s15
    %p12 = scmp.ge.s32.totalorder %s11, 4
    %s21 = sphi 0, %s23
    %s24 = sphi 0, %s21
    %s25 = sphi 0, %s24
    %s41 = sphi 0, %s25
    %s47 = sphi 0, %s49
    %s50 = sphi 0, %s47
    %s51 = sphi 0, %s50
    %s67 = sphi 0, %s51
    %s73 = sphi 0, %s75
    %s76 = sphi 0, %s73
    %s77 = sphi 0, %s76
    %s93 = sphi 0, %s77
    %s97 = sphi 0, %s97
    %s99 = sphi 0, %s97
    %s100 = sphi 0, %s99
    %s114 = sphi 0, %s100
    %s118 = sphi 0, %s118
    %s120 = sphi 0, %s118
    %s121 = sphi 0, %s120
    %s135 = sphi 0, %s121
    %s141 = sphi 0, %s143
    %s144 = sphi 0, %s141
    %s145 = sphi 0, %s144
    %s161 = sphi 0, %s145
  $region4: #{concat_squash_linear.1} parent=0 // loop_header_branch
    %14 = sbr.rel (%p12) target = $region8
  $region5: #{concat_squash_linear.1} parent=0 // loop_body
    %s16 = ssub.s32 %s11, 1
    %s17 = ssub.s32 %s11, 2
    %s18 = sadd.s32 %s11, 1
    %s19 = ssub.s32 %s11, %s18
    %p20 = scmp.eq.s32.totalorder %s19, 0
    %s22 = sadd.s32 %s21, 1
    %s23 = scalar_select %p20, %s21, %s22
    %p26 = pneg %p20
    %p27 = scmp.eq.s32.totalorder %s11, 1
    %p28 = por %p26, %p27
    %p29 = scmp.ne.s32.totalorder %s21, %s24
    %p30 = scmp.eq.s32.totalorder %s11, 0
    %p31 = por %p29, %p30
    %p32 = scmp.ne.s32.totalorder %s21, %s24
    %p33 = scmp.eq.s32.totalorder %s16, 1
    %p34 = por %p32, %p33
    %p35 = scmp.ne.s32.totalorder %s24, %s25
    %p36 = scmp.eq.s32.totalorder %s16, 0
    %p37 = por %p35, %p36
    %p38 = scmp.ne.s32.totalorder %s24, %s25
    %p39 = scmp.eq.s32.totalorder %s17, 1
    %p40 = por %p38, %p39
    %p42 = scmp.ne.s32.totalorder %s25, %s41
    %p43 = scmp.eq.s32.totalorder %s17, 0
    %p44 = por %p42, %p43
    %s45 = ssub.s32 %s11, %s18
    %p46 = scmp.eq.s32.totalorder %s45, 0
    %s48 = sadd.s32 %s47, 1
    %s49 = scalar_select %p46, %s47, %s48
    %p52 = pneg %p46
    %p53 = scmp.eq.s32.totalorder %s11, 1
    %p54 = por %p52, %p53
    %p55 = scmp.ne.s32.totalorder %s47, %s50
    %p56 = scmp.eq.s32.totalorder %s11, 0
    %p57 = por %p55, %p56
    %p58 = scmp.ne.s32.totalorder %s47, %s50
    %p59 = scmp.eq.s32.totalorder %s16, 1
    %p60 = por %p58, %p59
    %p61 = scmp.ne.s32.totalorder %s50, %s51
    %p62 = scmp.eq.s32.totalorder %s16, 0
    %p63 = por %p61, %p62
    %p64 = scmp.ne.s32.totalorder %s50, %s51
    %p65 = scmp.eq.s32.totalorder %s17, 1
    %p66 = por %p64, %p65
    %p68 = scmp.ne.s32.totalorder %s51, %s67
    %p69 = scmp.eq.s32.totalorder %s17, 0
    %p70 = por %p68, %p69
    %s71 = ssub.s32 %s11, %s18
    %p72 = scmp.eq.s32.totalorder %s71, 0
    %s74 = sadd.s32 %s73, 1
    %s75 = scalar_select %p72, %s73, %s74
    %p78 = pneg %p72
    %p79 = scmp.eq.s32.totalorder %s11, 1
    %p80 = por %p78, %p79
    %p81 = scmp.ne.s32.totalorder %s73, %s76
    %p82 = scmp.eq.s32.totalorder %s11, 0
    %p83 = por %p81, %p82
    %p84 = scmp.ne.s32.totalorder %s73, %s76
    %p85 = scmp.eq.s32.totalorder %s16, 1
    %p86 = por %p84, %p85
    %p87 = scmp.ne.s32.totalorder %s76, %s77
    %p88 = scmp.eq.s32.totalorder %s16, 0
    %p89 = por %p87, %p88
    %p90 = scmp.ne.s32.totalorder %s76, %s77
    %p91 = scmp.eq.s32.totalorder %s17, 1
    %p92 = por %p90, %p91
    %p94 = scmp.ne.s32.totalorder %s77, %s93
    %p95 = scmp.eq.s32.totalorder %s17, 0
    %p96 = por %p94, %p95
    %s98 = sadd.s32 %s97, 1
    %p101 = scmp.eq.s32.totalorder %s11, 1
    %p102 = scmp.ne.s32.totalorder %s97, %s99
    %p103 = scmp.eq.s32.totalorder %s11, 0
    %p104 = por %p102, %p103
    %p105 = scmp.ne.s32.totalorder %s97, %s99
    %p106 = scmp.eq.s32.totalorder %s16, 1
    %p107 = por %p105, %p106
    %p108 = scmp.ne.s32.totalorder %s99, %s100
    %p109 = scmp.eq.s32.totalorder %s16, 0
    %p110 = por %p108, %p109
    %p111 = scmp.ne.s32.totalorder %s99, %s100
    %p112 = scmp.eq.s32.totalorder %s17, 1
    %p113 = por %p111, %p112
    %p115 = scmp.ne.s32.totalorder %s100, %s114
    %p116 = scmp.eq.s32.totalorder %s17, 0
    %p117 = por %p115, %p116
    %s119 = sadd.s32 %s118, 1
    %p122 = scmp.eq.s32.totalorder %s11, 1
    %p123 = scmp.ne.s32.totalorder %s118, %s120
    %p124 = scmp.eq.s32.totalorder %s11, 0
    %p125 = por %p123, %p124
    %p126 = scmp.ne.s32.totalorder %s118, %s120
    %p127 = scmp.eq.s32.totalorder %s16, 1
    %p128 = por %p126, %p127
    %p129 = scmp.ne.s32.totalorder %s120, %s121
    %p130 = scmp.eq.s32.totalorder %s16, 0
    %p131 = por %p129, %p130
    %p132 = scmp.ne.s32.totalorder %s120, %s121
    %p133 = scmp.eq.s32.totalorder %s17, 1
    %p134 = por %p132, %p133
    %p136 = scmp.ne.s32.totalorder %s121, %s135
    %p137 = scmp.eq.s32.totalorder %s17, 0
    %p138 = por %p136, %p137
    %s139 = ssub.s32 %s11, %s18
    %p140 = scmp.eq.s32.totalorder %s139, 0
    %s142 = sadd.s32 %s141, 1
    %s143 = scalar_select %p140, %s141, %s142
    %p146 = pneg %p140
    %p147 = scmp.eq.s32.totalorder %s11, 1
    %p148 = por %p146, %p147
    %p149 = scmp.ne.s32.totalorder %s141, %s144
    %p150 = scmp.eq.s32.totalorder %s11, 0
    %p151 = por %p149, %p150
    %p152 = scmp.ne.s32.totalorder %s141, %s144
    %p153 = scmp.eq.s32.totalorder %s16, 1
    %p154 = por %p152, %p153
    %p155 = scmp.ne.s32.totalorder %s144, %s145
    %p156 = scmp.eq.s32.totalorder %s16, 0
    %p157 = por %p155, %p156
    %p158 = scmp.ne.s32.totalorder %s144, %s145
    %p159 = scmp.eq.s32.totalorder %s17, 1
    %p160 = por %p158, %p159
    %p162 = scmp.ne.s32.totalorder %s145, %s161
    %p163 = scmp.eq.s32.totalorder %s17, 0
    %p164 = por %p162, %p163
    %p165 = scmp.le.s32.totalorder 1, %s11
    %p166 = scmp.lt.s32.totalorder %s11, 3
    %p167 = pnand %p165, %p166
    %p168 = pneg %p167
    // Predicated region
    $region9: #{concat_squash_linear.1} parent=5 // pred_check
      _
    $region10: #{concat_squash_linear.1} parent=5 // pred_check_branch
      %170 = sbr.rel (%p167) target = $region12
    $region11: #{concat_squash_linear.1} parent=5 // pred_region
      %s171 = ssub.s32 %s11, 1
      // Predicated region
      $region13: #{concat_squash_linear.1} parent=11 // pred_check
        %p172 = pneg %p110
      $region14: #{concat_squash_linear.1} parent=11 // pred_check_branch
        %174 = sbr.rel (%p172) target = $region16
      $region15: #{concat_squash_linear.1} parent=11 // pred_region
        _
      $region16: #{concat_squash_linear.1} parent=11 // pred_fallthru
        _
      // Predicated region
      $region17: #{concat_squash_linear.1} parent=11 // pred_check
        %p175 = pneg %p131
      $region18: #{concat_squash_linear.1} parent=11 // pred_check_branch
        %177 = sbr.rel (%p175) target = $region20
      $region19: #{concat_squash_linear.1} parent=11 // pred_region
        _
      $region20: #{concat_squash_linear.1} parent=11 // pred_fallthru
        _
    $region12: #{concat_squash_linear.1} parent=5 // pred_fallthru
      _
    %p178 = scmp.lt.s32.totalorder %s11, 2
    // Predicated region
    $region21: #{concat_squash_linear.1} parent=5 // pred_check
      %p179 = pneg %p178
    $region22: #{concat_squash_linear.1} parent=5 // pred_check_branch
      %181 = sbr.rel (%p179) target = $region24
    $region23: #{concat_squash_linear.1} parent=5 // pred_region
      // Predicated region
      $region25: #{concat_squash_linear.1} parent=23 // pred_check
        %p182 = pneg %p31
      $region26: #{concat_squash_linear.1} parent=23 // pred_check_branch
        %184 = sbr.rel (%p182) target = $region28
      $region27: #{concat_squash_linear.1} parent=23 // pred_region
        %p185 = scmp.lt.s32.totalorder %s11, 1
        %s186 = scalar_select %p185, %s11, 1
        %s187 = smul.addr %s186, 4
        %s188 = scalar_lea.vmem %s0, %s187
      $region28: #{concat_squash_linear.1} parent=23 // pred_fallthru
        _
      // Predicated region
      $region29: #{concat_squash_linear.1} parent=23 // pred_check
        %p189 = pneg %p57
      $region30: #{concat_squash_linear.1} parent=23 // pred_check_branch
        %191 = sbr.rel (%p189) target = $region32
      $region31: #{concat_squash_linear.1} parent=23 // pred_region
        %p192 = scmp.lt.s32.totalorder %s11, 1
        %s193 = scalar_select %p192, %s11, 1
        %s194 = smul.addr %s193, 4
        %s195 = smul.addr %s194, 8
        %s196 = scalar_lea.vmem %s1, %s195
      $region32: #{concat_squash_linear.1} parent=23 // pred_fallthru
        _
      // Predicated region
      $region33: #{concat_squash_linear.1} parent=23 // pred_check
        %p197 = pneg %p83
      $region34: #{concat_squash_linear.1} parent=23 // pred_check_branch
        %199 = sbr.rel (%p197) target = $region36
      $region35: #{concat_squash_linear.1} parent=23 // pred_region
        %p200 = scmp.lt.s32.totalorder %s11, 1
        %s201 = scalar_select %p200, %s11, 1
        %s202 = smul.addr %s201, 4
        %s203 = smul.addr %s202, 8
        %s204 = scalar_lea.vmem %s2, %s203
      $region36: #{concat_squash_linear.1} parent=23 // pred_fallthru
        _
    $region24: #{concat_squash_linear.1} parent=5 // pred_fallthru
      _
    %p205 = scmp.le.s32.totalorder 1, %s11
    %p206 = scmp.lt.s32.totalorder %s11, 3
    %p207 = pnand %p205, %p206
    %p208 = pneg %p207
    // Predicated region
    $region37: #{concat_squash_linear.1} parent=5 // pred_check
      _
    $region38: #{concat_squash_linear.1} parent=5 // pred_check_branch
      %210 = sbr.rel (%p207) target = $region40
    $region39: #{concat_squash_linear.1} parent=5 // pred_region
      %s211 = ssub.s32 %s11, 1
      %p212 = scmp.lt.s32.totalorder %s16, 1
      %s213 = scalar_select %p212, %s16, 1
      %s214 = smul.addr %s213, 4
      %s215 = scalar_lea.vmem %s0, %s214
      %p216 = pneg %p37
      %p217 = pneg %p34
      %p218 = scmp.lt.s32.totalorder %s16, 1
      %s219 = scalar_select %p218, %s16, 1
      %s220 = smul.addr %s219, 4
      %s221 = smul.addr %s220, 8
      %s222 = scalar_lea.vmem %s1, %s221
      %p223 = pneg %p63
      %p224 = pneg %p60
      %p225 = scmp.lt.s32.totalorder %s16, 1
      %s226 = scalar_select %p225, %s16, 1
      %s227 = smul.addr %s226, 4
      %s228 = smul.addr %s227, 8
      %s229 = scalar_lea.vmem %s2, %s228
      %p230 = pneg %p89
      %p231 = pneg %p86
      %p232 = pneg %p110
      %p233 = pneg %p107
      %p234 = pneg %p131
      %p235 = pneg %p128
      %p236 = pneg %p157
      %p237 = pneg %p154
      %p238 = scmp.lt.s32.totalorder %s16, 1
      %s239 = scalar_select %p238, %s16, 1
      %s240 = smul.addr %s239, 4
      %s241 = smul.addr %s240, 8
      %s242 = scalar_lea.vmem %s5, %s241
      %p243 = scmp.lt.s32.totalorder %s16, 1
      %s244 = scalar_select %p243, %s16, 1
      %s245 = smul.addr %s244, 4
      %s246 = scalar_lea.vmem %s0, %s245
      %p247 = scmp.lt.s32.totalorder %s16, 1
      %s248 = scalar_select %p247, %s16, 1
      %s249 = smul.addr %s248, 4
      %s250 = smul.addr %s249, 8
      %s251 = scalar_lea.vmem %s1, %s250
      %p252 = scmp.lt.s32.totalorder %s16, 1
      %s253 = scalar_select %p252, %s16, 1
      %s254 = smul.addr %s253, 4
      %s255 = smul.addr %s254, 8
      %s256 = scalar_lea.vmem %s2, %s255
      %p257 = scmp.lt.s32.totalorder %s16, 1
      %s258 = scalar_select %p257, %s16, 1
      %s259 = smul.addr %s258, 4
      %s260 = smul.addr %s259, 8
      %s261 = scalar_lea.vmem %s5, %s260
      %v262 = vld [vmem:[%s3] sm:$0xff]
      %v263 = vld [vmem:[%s3 + $0x8] sm:$0xff]
      %v264 = vld [vmem:[%s3 + $0x10] sm:$0xff]
      %v265 = vld [vmem:[%s3 + $0x18] sm:$0xff]
      %v266 = vld [vmem:[%s4] sm:$0xff]
      %v267 = vld [vmem:[%s4 + $0x8] sm:$0xff]
      %v268 = vld [vmem:[%s4 + $0x10] sm:$0xff]
      %v269 = vld [vmem:[%s4 + $0x18] sm:$0xff]
      %v270 = vlaneseq
      %v271 = vand.u32 %v270, 127
      %vm272 = vcmp.lt.s32.totalorder %v271, 16
      %v273 = vsel %vm272, 1, 0
      %v274 = vcvt.s32.f32 %v273
      %v275 = vld [vmem:[%s246] sm:$0xf]
      %277 = vset.pattern.permute.xlu0 0
      %278 = vperm.xlu0 %277, %v262
      %v279 = vpop.permute.xlu0 %278
      %282 = vset.pattern.permute.xlu0 0
      %283 = vperm.xlu0 %282, %v263
      %v284 = vpop.permute.xlu0 %283
      %287 = vset.pattern.permute.xlu0 0
      %288 = vperm.xlu0 %287, %v264
      %v289 = vpop.permute.xlu0 %288
      %292 = vset.pattern.permute.xlu0 0
      %293 = vperm.xlu0 %292, %v265
      %v294 = vpop.permute.xlu0 %293
      %v296 = vlaneseq
      %v297 = vshrl.u32 %v296, 7
      %v298 = vsub.s32 0, %v297
      %v299 = vrot.slane %v275, %v298
      %v300 = vmul.f32 %v279, %v299
      %v301 = vmul.f32 %v284, %v299
      %v302 = vmul.f32 %v289, %v299
      %v303 = vmul.f32 %v294, %v299
      %v304 = vadd.f32 %v300, 0.0
      %v305 = vadd.f32 %v301, 0.0
      %v306 = vadd.f32 %v302, 0.0
      %v307 = vadd.f32 %v303, 0.0
      %308 = vset.pattern.permute.xlu0 1
      %309 = vperm.xlu0 %308, %v262
      %v310 = vpop.permute.xlu0 %309
      %312 = vset.pattern.permute.xlu0 1
      %313 = vperm.xlu0 %312, %v263
      %v314 = vpop.permute.xlu0 %313
      %316 = vset.pattern.permute.xlu0 1
      %317 = vperm.xlu0 %316, %v264
      %v318 = vpop.permute.xlu0 %317
      %320 = vset.pattern.permute.xlu0 1
      %321 = vperm.xlu0 %320, %v265
      %v322 = vpop.permute.xlu0 %321
      %v324 = vlaneseq
      %v325 = vshrl.u32 %v324, 7
      %v326 = vsub.s32 1, %v325
      %v327 = vrot.slane %v275, %v326
      %v328 = vmul.f32 %v310, %v327
      %v329 = vmul.f32 %v314, %v327
      %v330 = vmul.f32 %v318, %v327
      %v331 = vmul.f32 %v322, %v327
      %v332 = vadd.f32 %v304, %v328
      %v333 = vadd.f32 %v305, %v329
      %v334 = vadd.f32 %v306, %v330
      %v335 = vadd.f32 %v307, %v331
      %336 = vset.pattern.permute.xlu0 2
      %337 = vperm.xlu0 %336, %v262
      %v338 = vpop.permute.xlu0 %337
      %340 = vset.pattern.permute.xlu0 2
      %341 = vperm.xlu0 %340, %v263
      %v342 = vpop.permute.xlu0 %341
      %344 = vset.pattern.permute.xlu0 2
      %345 = vperm.xlu0 %344, %v264
      %v346 = vpop.permute.xlu0 %345
      %348 = vset.pattern.permute.xlu0 2
      %349 = vperm.xlu0 %348, %v265
      %v350 = vpop.permute.xlu0 %349
      %v352 = vlaneseq
      %v353 = vshrl.u32 %v352, 7
      %v354 = vsub.s32 2, %v353
      %v355 = vrot.slane %v275, %v354
      %v356 = vmul.f32 %v338, %v355
      %v357 = vmul.f32 %v342, %v355
      %v358 = vmul.f32 %v346, %v355
      %v359 = vmul.f32 %v350, %v355
      %v360 = vadd.f32 %v332, %v356
      %v361 = vadd.f32 %v333, %v357
      %v362 = vadd.f32 %v334, %v358
      %v363 = vadd.f32 %v335, %v359
      %364 = vset.pattern.permute.xlu0 3
      %365 = vperm.xlu0 %364, %v262
      %v366 = vpop.permute.xlu0 %365
      %368 = vset.pattern.permute.xlu0 3
      %369 = vperm.xlu0 %368, %v263
      %v370 = vpop.permute.xlu0 %369
      %372 = vset.pattern.permute.xlu0 3
      %373 = vperm.xlu0 %372, %v264
      %v374 = vpop.permute.xlu0 %373
      %376 = vset.pattern.permute.xlu0 3
      %377 = vperm.xlu0 %376, %v265
      %v378 = vpop.permute.xlu0 %377
      %v380 = vlaneseq
      %v381 = vshrl.u32 %v380, 7
      %v382 = vsub.s32 3, %v381
      %v383 = vrot.slane %v275, %v382
      %v384 = vmul.f32 %v366, %v383
      %v385 = vmul.f32 %v370, %v383
      %v386 = vmul.f32 %v374, %v383
      %v387 = vmul.f32 %v378, %v383
      %v388 = vadd.f32 %v360, %v384
      %v389 = vadd.f32 %v361, %v385
      %v390 = vadd.f32 %v362, %v386
      %v391 = vadd.f32 %v363, %v387
      %393 = vset.pattern.permute.xlu0 0
      %394 = vperm.xlu0 %393, %v266
      %v395 = vpop.permute.xlu0 %394
      %398 = vset.pattern.permute.xlu0 0
      %399 = vperm.xlu0 %398, %v267
      %v400 = vpop.permute.xlu0 %399
      %403 = vset.pattern.permute.xlu0 0
      %404 = vperm.xlu0 %403, %v268
      %v405 = vpop.permute.xlu0 %404
      %408 = vset.pattern.permute.xlu0 0
      %409 = vperm.xlu0 %408, %v269
      %v410 = vpop.permute.xlu0 %409
      %v412 = vadd.f32 %v388, %v395
      %v413 = vadd.f32 %v389, %v400
      %v414 = vadd.f32 %v390, %v405
      %v415 = vadd.f32 %v391, %v410
      %v416 = vmul.f32 %v412, %v274
      %v417 = vmul.f32 %v413, %v274
      %v418 = vmul.f32 %v414, %v274
      %v419 = vmul.f32 %v415, %v274
      %420 = vadd.xlane.f32.xlu0 %v416
      %v421 = vpop.xlane.xlu0 %420
      %422 = vadd.xlane.f32.xlu0 %v417
      %v423 = vpop.xlane.xlu0 %422
      %424 = vadd.xlane.f32.xlu0 %v418
      %v425 = vpop.xlane.xlu0 %424
      %426 = vadd.xlane.f32.xlu0 %v419
      %v427 = vpop.xlane.xlu0 %426
      %v428 = vmul.f32 %v421, 0.0625
      %v429 = vmul.f32 %v423, 0.0625
      %v430 = vmul.f32 %v425, 0.0625
      %v431 = vmul.f32 %v427, 0.0625
      %v432 = vsub.f32 %v412, %v428
      %v433 = vsub.f32 %v413, %v429
      %v434 = vsub.f32 %v414, %v430
      %v435 = vsub.f32 %v415, %v431
      %v436 = vmul.f32 %v432, %v274
      %v437 = vmul.f32 %v433, %v274
      %v438 = vmul.f32 %v434, %v274
      %v439 = vmul.f32 %v435, %v274
      %v440 = vmul.f32 %v436, %v436
      %v441 = vmul.f32 %v437, %v437
      %v442 = vmul.f32 %v438, %v438
      %v443 = vmul.f32 %v439, %v439
      %444 = vadd.xlane.f32.xlu0 %v440
      %v445 = vpop.xlane.xlu0 %444
      %446 = vadd.xlane.f32.xlu0 %v441
      %v447 = vpop.xlane.xlu0 %446
      %448 = vadd.xlane.f32.xlu0 %v442
      %v449 = vpop.xlane.xlu0 %448
      %450 = vadd.xlane.f32.xlu0 %v443
      %v451 = vpop.xlane.xlu0 %450
      %v452 = vmul.f32 %v445, 0.0625
      %v453 = vmul.f32 %v447, 0.0625
      %v454 = vmul.f32 %v449, 0.0625
      %v455 = vmul.f32 %v451, 0.0625
      %v456 = vadd.f32 %v452, 1e-05
      %v457 = vadd.f32 %v453, 1e-05
      %v458 = vadd.f32 %v454, 1e-05
      %v459 = vadd.f32 %v455, 1e-05
      %v460 = vrsqrt.pop %v456
      %v461 = vrsqrt.pop %v457
      %v462 = vrsqrt.pop %v458
      %v463 = vrsqrt.pop %v459
      %v464 = vmul.f32 %v432, %v460
      %v465 = vmul.f32 %v433, %v461
      %v466 = vmul.f32 %v434, %v462
      %v467 = vmul.f32 %v435, %v463
      %v468 = vld [vmem:[%s251] sm:$0xff]
      %v469 = vld [vmem:[%s251 + $0x8] sm:$0xff]
      %v470 = vld [vmem:[%s251 + $0x10] sm:$0xff]
      %v471 = vld [vmem:[%s251 + $0x18] sm:$0xff]
      %473 = vset.pattern.permute.xlu0 0
      %474 = vperm.xlu0 %473, %v468
      %v475 = vpop.permute.xlu0 %474
      %478 = vset.pattern.permute.xlu0 0
      %479 = vperm.xlu0 %478, %v469
      %v480 = vpop.permute.xlu0 %479
      %483 = vset.pattern.permute.xlu0 0
      %484 = vperm.xlu0 %483, %v470
      %v485 = vpop.permute.xlu0 %484
      %488 = vset.pattern.permute.xlu0 0
      %489 = vperm.xlu0 %488, %v471
      %v490 = vpop.permute.xlu0 %489
      %v492 = vmul.f32 %v464, %v475
      %v493 = vmul.f32 %v465, %v480
      %v494 = vmul.f32 %v466, %v485
      %v495 = vmul.f32 %v467, %v490
      %v496 = vld [vmem:[%s256] sm:$0xff]
      %v497 = vld [vmem:[%s256 + $0x8] sm:$0xff]
      %v498 = vld [vmem:[%s256 + $0x10] sm:$0xff]
      %v499 = vld [vmem:[%s256 + $0x18] sm:$0xff]
      %501 = vset.pattern.permute.xlu0 0
      %502 = vperm.xlu0 %501, %v496
      %v503 = vpop.permute.xlu0 %502
      %506 = vset.pattern.permute.xlu0 0
      %507 = vperm.xlu0 %506, %v497
      %v508 = vpop.permute.xlu0 %507
      %511 = vset.pattern.permute.xlu0 0
      %512 = vperm.xlu0 %511, %v498
      %v513 = vpop.permute.xlu0 %512
      %516 = vset.pattern.permute.xlu0 0
      %517 = vperm.xlu0 %516, %v499
      %v518 = vpop.permute.xlu0 %517
      %v520 = vadd.f32 %v492, %v503
      %v521 = vadd.f32 %v493, %v508
      %v522 = vadd.f32 %v494, %v513
      %v523 = vadd.f32 %v495, %v518
      %524 = vst [vmem:[%s261] sm:$0xff] %v520
      %525 = vst [vmem:[%s261 + $0x8] sm:$0xff] %v521
      %526 = vst [vmem:[%s261 + $0x10] sm:$0xff] %v522
      %527 = vst [vmem:[%s261 + $0x18] sm:$0xff] %v523
      %p528 = scmp.lt.s32.totalorder %s16, 1
      %s529 = scalar_select %p528, %s16, 1
      %s530 = smul.addr %s529, 4
      %s531 = smul.addr %s530, 8
      %s532 = scalar_lea.vmem %s5, %s531
      // Predicated region
      $region41: #{concat_squash_linear.1} parent=39 // pred_check
        %p533 = pneg %p154
      $region42: #{concat_squash_linear.1} parent=39 // pred_check_branch
        %535 = sbr.rel (%p533) target = $region44
      $region43: #{concat_squash_linear.1} parent=39 // pred_region
        _
      $region44: #{concat_squash_linear.1} parent=39 // pred_fallthru
        _
    $region40: #{concat_squash_linear.1} parent=5 // pred_fallthru
      _
    %p536 = scmp.le.s32.totalorder 2, %s11
    // Predicated region
    $region45: #{concat_squash_linear.1} parent=5 // pred_check
      %p537 = pneg %p536
    $region46: #{concat_squash_linear.1} parent=5 // pred_check_branch
      %539 = sbr.rel (%p537) target = $region48
    $region47: #{concat_squash_linear.1} parent=5 // pred_region
      %s540 = ssub.s32 %s11, 2
      // Predicated region
      $region49: #{concat_squash_linear.1} parent=47 // pred_check
        %p541 = pneg %p160
      $region50: #{concat_squash_linear.1} parent=47 // pred_check_branch
        %543 = sbr.rel (%p541) target = $region52
      $region51: #{concat_squash_linear.1} parent=47 // pred_region
        %p544 = scmp.lt.s32.totalorder %s17, 1
        %s545 = scalar_select %p544, %s17, 1
        %s546 = smul.addr %s545, 4
        %s547 = smul.addr %s546, 8
        %s548 = scalar_lea.vmem %s5, %s547
      $region52: #{concat_squash_linear.1} parent=47 // pred_fallthru
        _
    $region48: #{concat_squash_linear.1} parent=5 // pred_fallthru
      _
  $region6: #{concat_squash_linear.1} parent=0 // loop_footer
    %s15 = sadd.s32 1, %s11
  $region7: #{concat_squash_linear.1} parent=0 // loop_footer_branch
    %10 = sbr.rel target = $region3
  $region8: #{concat_squash_linear.1} parent=0 // loop_exit
    _

</llo_original>
